<compile_context>
chip_gen: v6e
topology: v6e:2x2x1
jax: 0.10.0
libtpu: 0.0.40
codegen_flags: <defaults>
</compile_context>

<pallas_src>
import jax
import jax.numpy as jnp
from jax.experimental import pallas as pl
from jax.experimental.pallas import tpu as pltpu


# --------------------------------------------------------------------------- #
# Kernel
# --------------------------------------------------------------------------- #
def _mlp_kernel(x_ref,
                w1_ref, b1_ref,
                w2_ref, b2_ref,
                w4_ref, b4_ref,
                w3_ref, b3_ref,
                o_ref):
    x = x_ref[...]                                    # (tile_b, in_dim)  f32
    tile_b = x.shape[0]
    in_dim = w1_ref.shape[0]                          # tiny (X_dim + psi_dim)
    hp = w1_ref.shape[1]                              # hidden, padded to 128

    # ---- fc1 + tanh: K is tiny, do it as VPU broadcast FMAs (no MXU pass) ----
    acc = jnp.zeros((tile_b, hp), jnp.float32) + b1_ref[...]
    for k in range(in_dim):                           # static unrolled loop
        acc = acc + x[:, k:k + 1] * w1_ref[k:k + 1, :]
    h1 = jnp.tanh(acc)

    # ---- fc2 + tanh (MXU) ----
    h2 = jnp.tanh(
        jnp.dot(h1.astype(w2_ref.dtype), w2_ref[...],
                preferred_element_type=jnp.float32) + b2_ref[...]
    )

    # ---- fc4 + leaky_relu (PyTorch default negative_slope = 0.01) ----
    z = (jnp.dot(h2.astype(w4_ref.dtype), w4_ref[...],
                 preferred_element_type=jnp.float32) + b4_ref[...])
    h3 = jnp.where(z > 0, z, 0.01 * z)

    # ---- fc3 (no activation), narrow (out_dim-lane) output ----
    o_ref[...] = (
        jnp.dot(h3.astype(w3_ref.dtype), w3_ref[...],
                preferred_element_type=jnp.float32) + b3_ref[...]
    ).astype(o_ref.dtype)


# --------------------------------------------------------------------------- #
# Wrapper
# --------------------------------------------------------------------------- #
def _round_up(n, m):
    return ((n + m - 1) // m) * m


def _pad_to(a, shape):
    pads = [(0, t - s) for s, t in zip(a.shape, shape)]
    return jnp.pad(a, pads)


def _derive_tile_b(B, tile_b, use_bf16):
    # bf16 activations pack 16 sublanes per vreg; keep the tile aligned.
    align = 16 if use_bf16 else 8
    if tile_b is None:
        # Large tiles amortize per-step pipeline overhead ...
        tile_b = min(_round_up(B, align), 1024)
        # ... but keep >= 2 grid steps for non-trivial B so v7x's second
        # TensorCore (and the software pipeline) actually get work.
        if B > align:
            tile_b = min(tile_b, _round_up(pl.cdiv(B, 2), align))
    # Hard cap keeps the double-buffered working set a few MiB -> fits the
    # default scoped VMEM on every generation (incl. v5e 16 MiB, v7x 64 MiB).
    tile_b = _round_up(max(align, min(int(tile_b), 2048)), align)
    return tile_b


def net_forward(x, params, *, tile_b=None, use_bf16=False):
    """x: [B, X_dim + psi_dim] float32. params: dict of weights/biases.

    Returns [B, out_dim] float32. Exact (f32) by default; use_bf16=True runs
    the three hidden matmuls in bf16 with f32 accumulation.
    """
    B, in_dim = x.shape
    hidden = params["w1"].shape[1]
    out_dim = params["w3"].shape[1]

    # Lane-dense hidden dim (multiple of 128). Output dim is left narrow.
    hp = _round_up(hidden, 128)
    mm_dtype = jnp.bfloat16 if use_bf16 else jnp.float32

    # Zero-pad weights/biases (extra cols of layer k AND extra rows of layer
    # k+1 are zero, so padded lanes never leak into the result).
    w1 = _pad_to(params["w1"], (in_dim, hp))                      # f32 (VPU path)
    b1 = _pad_to(params["b1"], (1, hp))
    w2 = _pad_to(params["w2"], (hp, hp)).astype(mm_dtype)
    b2 = _pad_to(params["b2"], (1, hp))
    w4 = _pad_to(params["w4"], (hp, hp)).astype(mm_dtype)
    b4 = _pad_to(params["b4"], (1, hp))
    w3 = _pad_to(params["w3"], (hp, out_dim)).astype(mm_dtype)    # cols NOT padded
    b3 = params["b3"].reshape(1, out_dim)

    # Batch tiling.
    tile_b = _derive_tile_b(B, tile_b, use_bf16)
    b_pad = _round_up(B, tile_b)
    x_p = _pad_to(x, (b_pad, in_dim))

    grid = (b_pad // tile_b,)

    def resident(a):
        # Constant block index -> DMA'd once, stays VMEM-resident across grid.
        return pl.BlockSpec(a.shape, lambda i: (0, 0))

    y = pl.pallas_call(
        _mlp_kernel,
        out_shape=jax.ShapeDtypeStruct((b_pad, out_dim), jnp.float32),
        grid=grid,
        in_specs=[
            pl.BlockSpec((tile_b, in_dim), lambda i: (i, 0)),     # x: batch-tiled
            resident(w1), resident(b1),
            resident(w2), resident(b2),
            resident(w4), resident(b4),
            resident(w3), resident(b3),
        ],
        # (tile_b, out_dim) spans the full output width -> contiguous DMA,
        # 16x fewer writeback bytes than a 128-lane padded output.
        out_specs=pl.BlockSpec((tile_b, out_dim), lambda i: (i, 0)),
        compiler_params=pltpu.CompilerParams(
            dimension_semantics=("parallel",),
            vmem_limit_bytes=32 * 1024 * 1024,
        ),
    )(x_p, w1, b1, w2, b2, w4, b4, w3, b3)

    return y[:B, :]


# --------------------------------------------------------------------------- #
# Parameter init (matches the PyTorch module) + pure-JAX reference
# --------------------------------------------------------------------------- #
def xavier_normal(key, fan_in, fan_out):
    # matches torch.nn.init.xavier_normal_ (gain=1.0)
    std = (2.0 / (fan_in + fan_out)) ** 0.5
    # PyTorch weight is [out, in]; we store [in, out] for the kernel.
    return std * jax.random.normal(key, (fan_in, fan_out), dtype=jnp.float32)


def init_params(key, out_dim, psi_dim, hidden_dim=100, X_dim=1):
    in_dim = X_dim + psi_dim
    k1, k2, k3, k4 = jax.random.split(key, 4)
    return {
        "w1": xavier_normal(k1, in_dim, hidden_dim),
        "b1": jnp.zeros((1, hidden_dim), jnp.float32),
        "w2": xavier_normal(k2, hidden_dim, hidden_dim),
        "b2": jnp.zeros((1, hidden_dim), jnp.float32),
        "w4": xavier_normal(k4, hidden_dim, hidden_dim),
        "b4": jnp.zeros((1, hidden_dim), jnp.float32),
        "w3": xavier_normal(k3, hidden_dim, out_dim),
        "b3": jnp.zeros((1, out_dim), jnp.float32),
    }


def reference_forward(x, p):
    h1 = jnp.tanh(x @ p["w1"] + p["b1"])
    h2 = jnp.tanh(h1 @ p["w2"] + p["b2"])
    z = h2 @ p["w4"] + p["b4"]
    h3 = jnp.where(z > 0, z, 0.01 * z)
    return h3 @ p["w3"] + p["b3"]


# --------------------------------------------------------------------------- #
# Main
# --------------------------------------------------------------------------- #
if __name__ == "__main__":
    # Small shapes consistent with the module: X_dim=1, psi_dim=3, hidden=32, out=8
    out_dim, psi_dim, hidden_dim, X_dim = 8, 3, 32, 1
    batch = 16

    key = jax.random.PRNGKey(0)
    kp, kx = jax.random.split(key)
    params = init_params(kp, out_dim, psi_dim, hidden_dim=hidden_dim, X_dim=X_dim)
    x = jax.random.normal(kx, (batch, X_dim + psi_dim), dtype=jnp.float32)

    y_ref = reference_forward(x, params)

    # f32 path: auto tile derivation gives tile_b=8 -> 2 grid steps at batch=16,
    # exercising the pipelined / megacore-sharded path. Exact vs reference.
    y = net_forward(x, params)
    jax.block_until_ready(y)
    assert y.shape == (batch, out_dim)
    assert jnp.allclose(y, y_ref, atol=1e-5, rtol=1e-5)

    # bf16-matmul path (f32 accumulation): looser tolerance.
    y_bf16 = net_forward(x, params, use_bf16=True)
    jax.block_until_ready(y_bf16)
    assert jnp.allclose(y_bf16, y_ref, atol=5e-2, rtol=5e-2)

    print("KERNEL_OK")
</pallas_src>

<mosaic_0001>
module attributes {stable_mosaic.version = 11 : i64} {
  func.func @_mlp_kernel(%arg0: i32, %arg1: memref<8x4xf32, #tpu.memory_space<vmem>>, %arg2: memref<4x128xf32, #tpu.memory_space<vmem>>, %arg3: memref<1x128xf32, #tpu.memory_space<vmem>>, %arg4: memref<128x128xf32, #tpu.memory_space<vmem>>, %arg5: memref<1x128xf32, #tpu.memory_space<vmem>>, %arg6: memref<128x128xf32, #tpu.memory_space<vmem>>, %arg7: memref<1x128xf32, #tpu.memory_space<vmem>>, %arg8: memref<128x8xf32, #tpu.memory_space<vmem>>, %arg9: memref<1x8xf32, #tpu.memory_space<vmem>>, %arg10: memref<8x8xf32, #tpu.memory_space<vmem>>) attributes {dimension_semantics = [#tpu.dimension_semantics<parallel>], iteration_bounds = array<i64: 2>, scalar_prefetch = 0 : i64, scratch_operands = 0 : i64, tpu.core_type = #tpu.core_type<tc>, window_params = [{transform_indices = @transform_0, window_bounds = array<i64: 8, 4>}, {pipeline_mode = #tpu.pipeline_mode<synchronous>, transform_indices = @transform_1, window_bounds = array<i64: 4, 128>}, {pipeline_mode = #tpu.pipeline_mode<synchronous>, transform_indices = @transform_2, window_bounds = array<i64: 1, 128>}, {pipeline_mode = #tpu.pipeline_mode<synchronous>, transform_indices = @transform_3, window_bounds = array<i64: 128, 128>}, {pipeline_mode = #tpu.pipeline_mode<synchronous>, transform_indices = @transform_4, window_bounds = array<i64: 1, 128>}, {pipeline_mode = #tpu.pipeline_mode<synchronous>, transform_indices = @transform_5, window_bounds = array<i64: 128, 128>}, {pipeline_mode = #tpu.pipeline_mode<synchronous>, transform_indices = @transform_6, window_bounds = array<i64: 1, 128>}, {pipeline_mode = #tpu.pipeline_mode<synchronous>, transform_indices = @transform_7, window_bounds = array<i64: 128, 8>}, {pipeline_mode = #tpu.pipeline_mode<synchronous>, transform_indices = @transform_8, window_bounds = array<i64: 1, 8>}, {transform_indices = @transform_9, window_bounds = array<i64: 8, 8>}]} {
    %c0 = arith.constant 0 : index
    %c0_0 = arith.constant 0 : index
    %0 = vector.load %arg1[%c0, %c0_0] : memref<8x4xf32, #tpu.memory_space<vmem>>, vector<8x4xf32>
    %cst = arith.constant 0.000000e+00 : f32
    %1 = vector.broadcast %cst : f32 to vector<8x128xf32>
    %c0_1 = arith.constant 0 : index
    %c0_2 = arith.constant 0 : index
    %2 = vector.load %arg3[%c0_1, %c0_2] : memref<1x128xf32, #tpu.memory_space<vmem>>, vector<1x128xf32>
    %3 = vector.broadcast %2 : vector<1x128xf32> to vector<8x128xf32>
    %4 = arith.addf %1, %3 : vector<8x128xf32>
    %5 = vector.extract_strided_slice %0 {offsets = [0, 0], sizes = [8, 1], strides = [1, 1]} : vector<8x4xf32> to vector<8x1xf32>
    %c0_3 = arith.constant 0 : index
    %c0_4 = arith.constant 0 : index
    %6 = vector.load %arg2[%c0_3, %c0_4] : memref<4x128xf32, #tpu.memory_space<vmem>>, vector<1x128xf32>
    %7 = vector.broadcast %5 : vector<8x1xf32> to vector<8x128xf32>
    %8 = vector.broadcast %6 : vector<1x128xf32> to vector<8x128xf32>
    %9 = arith.mulf %7, %8 : vector<8x128xf32>
    %10 = arith.addf %4, %9 : vector<8x128xf32>
    %11 = vector.extract_strided_slice %0 {offsets = [0, 1], sizes = [8, 1], strides = [1, 1]} : vector<8x4xf32> to vector<8x1xf32>
    %c1 = arith.constant 1 : index
    %c0_5 = arith.constant 0 : index
    %12 = vector.load %arg2[%c1, %c0_5] : memref<4x128xf32, #tpu.memory_space<vmem>>, vector<1x128xf32>
    %13 = vector.broadcast %11 : vector<8x1xf32> to vector<8x128xf32>
    %14 = vector.broadcast %12 : vector<1x128xf32> to vector<8x128xf32>
    %15 = arith.mulf %13, %14 : vector<8x128xf32>
    %16 = arith.addf %10, %15 : vector<8x128xf32>
    %17 = vector.extract_strided_slice %0 {offsets = [0, 2], sizes = [8, 1], strides = [1, 1]} : vector<8x4xf32> to vector<8x1xf32>
    %c2 = arith.constant 2 : index
    %c0_6 = arith.constant 0 : index
    %18 = vector.load %arg2[%c2, %c0_6] : memref<4x128xf32, #tpu.memory_space<vmem>>, vector<1x128xf32>
    %19 = vector.broadcast %17 : vector<8x1xf32> to vector<8x128xf32>
    %20 = vector.broadcast %18 : vector<1x128xf32> to vector<8x128xf32>
    %21 = arith.mulf %19, %20 : vector<8x128xf32>
    %22 = arith.addf %16, %21 : vector<8x128xf32>
    %23 = vector.extract_strided_slice %0 {offsets = [0, 3], sizes = [8, 1], strides = [1, 1]} : vector<8x4xf32> to vector<8x1xf32>
    %c3 = arith.constant 3 : index
    %c0_7 = arith.constant 0 : index
    %24 = vector.load %arg2[%c3, %c0_7] : memref<4x128xf32, #tpu.memory_space<vmem>>, vector<1x128xf32>
    %25 = vector.broadcast %23 : vector<8x1xf32> to vector<8x128xf32>
    %26 = vector.broadcast %24 : vector<1x128xf32> to vector<8x128xf32>
    %27 = arith.mulf %25, %26 : vector<8x128xf32>
    %28 = arith.addf %22, %27 : vector<8x128xf32>
    %29 = math.tanh %28 : vector<8x128xf32>
    %c0_8 = arith.constant 0 : index
    %c0_9 = arith.constant 0 : index
    %30 = vector.load %arg4[%c0_8, %c0_9] : memref<128x128xf32, #tpu.memory_space<vmem>>, vector<128x128xf32>
    %cst_10 = arith.constant dense<0.000000e+00> : vector<8x128xf32>
    %31 = tpu.matmul %29, %30, %cst_10 {dimension_numbers = #tpu.dot_dimension_numbers<[1], [0], [0], [1], [0, 0, 1, 1], [], []>} : vector<8x128xf32>, vector<128x128xf32>, vector<8x128xf32> -> vector<8x128xf32>
    %c0_11 = arith.constant 0 : index
    %c0_12 = arith.constant 0 : index
    %32 = vector.load %arg5[%c0_11, %c0_12] : memref<1x128xf32, #tpu.memory_space<vmem>>, vector<1x128xf32>
    %33 = vector.broadcast %32 : vector<1x128xf32> to vector<8x128xf32>
    %34 = arith.addf %31, %33 : vector<8x128xf32>
    %35 = math.tanh %34 : vector<8x128xf32>
    %c0_13 = arith.constant 0 : index
    %c0_14 = arith.constant 0 : index
    %36 = vector.load %arg6[%c0_13, %c0_14] : memref<128x128xf32, #tpu.memory_space<vmem>>, vector<128x128xf32>
    %cst_15 = arith.constant dense<0.000000e+00> : vector<8x128xf32>
    %37 = tpu.matmul %35, %36, %cst_15 {dimension_numbers = #tpu.dot_dimension_numbers<[1], [0], [0], [1], [0, 0, 1, 1], [], []>} : vector<8x128xf32>, vector<128x128xf32>, vector<8x128xf32> -> vector<8x128xf32>
    %c0_16 = arith.constant 0 : index
    %c0_17 = arith.constant 0 : index
    %38 = vector.load %arg7[%c0_16, %c0_17] : memref<1x128xf32, #tpu.memory_space<vmem>>, vector<1x128xf32>
    %39 = vector.broadcast %38 : vector<1x128xf32> to vector<8x128xf32>
    %40 = arith.addf %37, %39 : vector<8x128xf32>
    %cst_18 = arith.constant 0.000000e+00 : f32
    %41 = vector.broadcast %cst_18 : f32 to vector<8x128xf32>
    %42 = arith.cmpf ogt, %40, %41 : vector<8x128xf32>
    %cst_19 = arith.constant 0.00999999977 : f32
    %43 = vector.broadcast %cst_19 : f32 to vector<8x128xf32>
    %44 = arith.mulf %43, %40 : vector<8x128xf32>
    %45 = arith.select %42, %40, %44 : vector<8x128xi1>, vector<8x128xf32>
    %c0_20 = arith.constant 0 : index
    %c0_21 = arith.constant 0 : index
    %46 = vector.load %arg8[%c0_20, %c0_21] : memref<128x8xf32, #tpu.memory_space<vmem>>, vector<128x8xf32>
    %cst_22 = arith.constant dense<0.000000e+00> : vector<8x8xf32>
    %47 = tpu.matmul %45, %46, %cst_22 {dimension_numbers = #tpu.dot_dimension_numbers<[1], [0], [0], [1], [0, 0, 1, 1], [], []>} : vector<8x128xf32>, vector<128x8xf32>, vector<8x8xf32> -> vector<8x8xf32>
    %c0_23 = arith.constant 0 : index
    %c0_24 = arith.constant 0 : index
    %48 = vector.load %arg9[%c0_23, %c0_24] : memref<1x8xf32, #tpu.memory_space<vmem>>, vector<1x8xf32>
    %49 = vector.broadcast %48 : vector<1x8xf32> to vector<8x8xf32>
    %50 = arith.addf %47, %49 : vector<8x8xf32>
    %c0_25 = arith.constant 0 : index
    %c0_26 = arith.constant 0 : index
    %51 = vector.load %arg10[%c0_25, %c0_26] : memref<8x8xf32, #tpu.memory_space<vmem>>, vector<8x8xf32>
    tpu.vector_store %arg10[%c0_25, %c0_26], %50 {strides = array<i32>} : memref<8x8xf32, #tpu.memory_space<vmem>>, vector<8x8xf32>,
    return
  }
  func.func @transform_0(%arg0: i32) -> (i32, i32) {
    %c0_i32 = arith.constant 0 : i32
    %c0_i32_0 = arith.constant 0 : i32
    return %arg0, %c0_i32 : i32, i32
  }
  func.func @transform_1(%arg0: i32) -> (i32, i32) {
    %c0_i32 = arith.constant 0 : i32
    %c0_i32_0 = arith.constant 0 : i32
    %c0_i32_1 = arith.constant 0 : i32
    return %c0_i32, %c0_i32_0 : i32, i32
  }
  func.func @transform_2(%arg0: i32) -> (i32, i32) {
    %c0_i32 = arith.constant 0 : i32
    %c0_i32_0 = arith.constant 0 : i32
    %c0_i32_1 = arith.constant 0 : i32
    return %c0_i32, %c0_i32_0 : i32, i32
  }
  func.func @transform_3(%arg0: i32) -> (i32, i32) {
    %c0_i32 = arith.constant 0 : i32
    %c0_i32_0 = arith.constant 0 : i32
    %c0_i32_1 = arith.constant 0 : i32
    return %c0_i32, %c0_i32_0 : i32, i32
  }
  func.func @transform_4(%arg0: i32) -> (i32, i32) {
    %c0_i32 = arith.constant 0 : i32
    %c0_i32_0 = arith.constant 0 : i32
    %c0_i32_1 = arith.constant 0 : i32
    return %c0_i32, %c0_i32_0 : i32, i32
  }
  func.func @transform_5(%arg0: i32) -> (i32, i32) {
    %c0_i32 = arith.constant 0 : i32
    %c0_i32_0 = arith.constant 0 : i32
    %c0_i32_1 = arith.constant 0 : i32
    return %c0_i32, %c0_i32_0 : i32, i32
  }
  func.func @transform_6(%arg0: i32) -> (i32, i32) {
    %c0_i32 = arith.constant 0 : i32
    %c0_i32_0 = arith.constant 0 : i32
    %c0_i32_1 = arith.constant 0 : i32
    return %c0_i32, %c0_i32_0 : i32, i32
  }
  func.func @transform_7(%arg0: i32) -> (i32, i32) {
    %c0_i32 = arith.constant 0 : i32
    %c0_i32_0 = arith.constant 0 : i32
    %c0_i32_1 = arith.constant 0 : i32
    return %c0_i32, %c0_i32_0 : i32, i32
  }
  func.func @transform_8(%arg0: i32) -> (i32, i32) {
    %c0_i32 = arith.constant 0 : i32
    %c0_i32_0 = arith.constant 0 : i32
    %c0_i32_1 = arith.constant 0 : i32
    return %c0_i32, %c0_i32_0 : i32, i32
  }
  func.func @transform_9(%arg0: i32) -> (i32, i32) {
    %c0_i32 = arith.constant 0 : i32
    %c0_i32_0 = arith.constant 0 : i32
    return %arg0, %c0_i32 : i32, i32
  }
}

</mosaic_0001>

<llo_original>
// kernel: tpu_custom_call.1
$region0: #{tpu_custom_call.1}
  #allocation0 [shape = 'u32[]', space=smem, size = 0x4, offset = 0x4, fixed_abs, tag = 'smem constant byte address 0x4 - core index']
  #allocation1 [shape = 'u32[144,128]{1,0:T(1,128)}', space=vmem, size = 0x12000, scoped, tag = 'internal scratch']
  %s0 = inlined_call_operand.vmem [shape: f32[16,4], index: 0, kind: input, shape index: {}]
  %s1 = inlined_call_operand.vmem [shape: f32[4,128], index: 1, kind: input, shape index: {}]
  %s2 = inlined_call_operand.vmem [shape: f32[1,128], index: 2, kind: input, shape index: {}]
  %s3 = inlined_call_operand.vmem [shape: f32[128,128], index: 3, kind: input, shape index: {}]
  %s4 = inlined_call_operand.vmem [shape: f32[1,128], index: 4, kind: input, shape index: {}]
  %s5 = inlined_call_operand.hbm [shape: f32[128,128], index: 5, kind: input, shape index: {}]
  %s6 = inlined_call_operand.vmem [shape: f32[1,128], index: 6, kind: input, shape index: {}]
  %s7 = inlined_call_operand.vmem [shape: f32[128,8], index: 7, kind: input, shape index: {}]
  %s8 = inlined_call_operand.vmem [shape: f32[1,8], index: 8, kind: input, shape index: {}]
  %s9 = inlined_call_operand.vmem [shape: f32[16,8], index: 9, kind: output, shape index: {}]
  %s10 = sld [smem:[#allocation0]]
  $region73: #{tpu_custom_call.1} parent=0
    _
  %s12 = ssub.s32 1, %s10
  %s13 = scalar_select 0, %s12, %s10
  $region1: #{tpu_custom_call.1} parent=0
    #allocation2 [shape = 'u8[65536]{0}', space=vmem, size = 0x10000, scoped, tag = 'input window, operand 5, single buffered']
    #allocation3 [shape = 's32[2]{0}', space=sflag, size = 0x8, scoped, tag = 'scoped memory for tpu_custom_call.1']
    %14 = vsyncpa [#allocation3], 0
    loop: start=0, step=1, limit=4
    $region2: #{tpu_custom_call.1} parent=1 // loop_pre_header
      _
    $region3: #{tpu_custom_call.1} parent=1 // loop_header
      %s16 = sphi 0, %s20
      %p17 = scmp.ge.s32.totalorder %s16, 4
      %s26 = sphi 0, %s28
      %s29 = sphi 0, %s26
      %s30 = sphi 0, %s29
      %s46 = sphi 0, %s30
      %s50 = sphi 0, %s50
      %s52 = sphi 0, %s50
      %s53 = sphi 0, %s52
      %s67 = sphi 0, %s53
      %s71 = sphi 0, %s71
      %s73 = sphi 0, %s71
      %s74 = sphi 0, %s73
      %s88 = sphi 0, %s74
      %s92 = sphi 0, %s92
      %s94 = sphi 0, %s92
      %s95 = sphi 0, %s94
      %s109 = sphi 0, %s95
      %s113 = sphi 0, %s113
      %s115 = sphi 0, %s113
      %s116 = sphi 0, %s115
      %s130 = sphi 0, %s116
      %s134 = sphi 0, %s134
      %s136 = sphi 0, %s134
      %s137 = sphi 0, %s136
      %s151 = sphi 0, %s137
      %s155 = sphi 0, %s155
      %s157 = sphi 0, %s155
      %s158 = sphi 0, %s157
      %s172 = sphi 0, %s158
      %s176 = sphi 0, %s176
      %s178 = sphi 0, %s176
      %s179 = sphi 0, %s178
      %s193 = sphi 0, %s179
      %s197 = sphi 0, %s197
      %s199 = sphi 0, %s197
      %s200 = sphi 0, %s199
      %s214 = sphi 0, %s200
      %s220 = sphi 0, %s222
      %s223 = sphi 0, %s220
      %s224 = sphi 0, %s223
      %s240 = sphi 0, %s224
    $region4: #{tpu_custom_call.1} parent=1 // loop_header_branch
      %19 = sbr.rel (%p17) target = $region8
    $region5: #{tpu_custom_call.1} parent=1 // loop_body
      %s21 = ssub.s32 %s16, 1
      %s22 = ssub.s32 %s16, 2
      %s23 = sadd.s32 %s16, 1
      %s24 = ssub.s32 %s16, %s23
      %p25 = scmp.eq.s32.totalorder %s24, 0
      %s27 = sadd.s32 %s26, 1
      %s28 = scalar_select %p25, %s26, %s27
      %p31 = pneg %p25
      %p32 = scmp.eq.s32.totalorder %s16, 1
      %p33 = por %p31, %p32
      %p34 = scmp.ne.s32.totalorder %s26, %s29
      %p35 = scmp.eq.s32.totalorder %s16, 0
      %p36 = por %p34, %p35
      %p37 = scmp.ne.s32.totalorder %s26, %s29
      %p38 = scmp.eq.s32.totalorder %s21, 1
      %p39 = por %p37, %p38
      %p40 = scmp.ne.s32.totalorder %s29, %s30
      %p41 = scmp.eq.s32.totalorder %s21, 0
      %p42 = por %p40, %p41
      %p43 = scmp.ne.s32.totalorder %s29, %s30
      %p44 = scmp.eq.s32.totalorder %s22, 1
      %p45 = por %p43, %p44
      %p47 = scmp.ne.s32.totalorder %s30, %s46
      %p48 = scmp.eq.s32.totalorder %s22, 0
      %p49 = por %p47, %p48
      %s51 = sadd.s32 %s50, 1
      %p54 = scmp.eq.s32.totalorder %s16, 1
      %p55 = scmp.ne.s32.totalorder %s50, %s52
      %p56 = scmp.eq.s32.totalorder %s16, 0
      %p57 = por %p55, %p56
      %p58 = scmp.ne.s32.totalorder %s50, %s52
      %p59 = scmp.eq.s32.totalorder %s21, 1
      %p60 = por %p58, %p59
      %p61 = scmp.ne.s32.totalorder %s52, %s53
      %p62 = scmp.eq.s32.totalorder %s21, 0
      %p63 = por %p61, %p62
      %p64 = scmp.ne.s32.totalorder %s52, %s53
      %p65 = scmp.eq.s32.totalorder %s22, 1
      %p66 = por %p64, %p65
      %p68 = scmp.ne.s32.totalorder %s53, %s67
      %p69 = scmp.eq.s32.totalorder %s22, 0
      %p70 = por %p68, %p69
      %s72 = sadd.s32 %s71, 1
      %p75 = scmp.eq.s32.totalorder %s16, 1
      %p76 = scmp.ne.s32.totalorder %s71, %s73
      %p77 = scmp.eq.s32.totalorder %s16, 0
      %p78 = por %p76, %p77
      %p79 = scmp.ne.s32.totalorder %s71, %s73
      %p80 = scmp.eq.s32.totalorder %s21, 1
      %p81 = por %p79, %p80
      %p82 = scmp.ne.s32.totalorder %s73, %s74
      %p83 = scmp.eq.s32.totalorder %s21, 0
      %p84 = por %p82, %p83
      %p85 = scmp.ne.s32.totalorder %s73, %s74
      %p86 = scmp.eq.s32.totalorder %s22, 1
      %p87 = por %p85, %p86
      %p89 = scmp.ne.s32.totalorder %s74, %s88
      %p90 = scmp.eq.s32.totalorder %s22, 0
      %p91 = por %p89, %p90
      %s93 = sadd.s32 %s92, 1
      %p96 = scmp.eq.s32.totalorder %s16, 1
      %p97 = scmp.ne.s32.totalorder %s92, %s94
      %p98 = scmp.eq.s32.totalorder %s16, 0
      %p99 = por %p97, %p98
      %p100 = scmp.ne.s32.totalorder %s92, %s94
      %p101 = scmp.eq.s32.totalorder %s21, 1
      %p102 = por %p100, %p101
      %p103 = scmp.ne.s32.totalorder %s94, %s95
      %p104 = scmp.eq.s32.totalorder %s21, 0
      %p105 = por %p103, %p104
      %p106 = scmp.ne.s32.totalorder %s94, %s95
      %p107 = scmp.eq.s32.totalorder %s22, 1
      %p108 = por %p106, %p107
      %p110 = scmp.ne.s32.totalorder %s95, %s109
      %p111 = scmp.eq.s32.totalorder %s22, 0
      %p112 = por %p110, %p111
      %s114 = sadd.s32 %s113, 1
      %p117 = scmp.eq.s32.totalorder %s16, 1
      %p118 = scmp.ne.s32.totalorder %s113, %s115
      %p119 = scmp.eq.s32.totalorder %s16, 0
      %p120 = por %p118, %p119
      %p121 = scmp.ne.s32.totalorder %s113, %s115
      %p122 = scmp.eq.s32.totalorder %s21, 1
      %p123 = por %p121, %p122
      %p124 = scmp.ne.s32.totalorder %s115, %s116
      %p125 = scmp.eq.s32.totalorder %s21, 0
      %p126 = por %p124, %p125
      %p127 = scmp.ne.s32.totalorder %s115, %s116
      %p128 = scmp.eq.s32.totalorder %s22, 1
      %p129 = por %p127, %p128
      %p131 = scmp.ne.s32.totalorder %s116, %s130
      %p132 = scmp.eq.s32.totalorder %s22, 0
      %p133 = por %p131, %p132
      %s135 = sadd.s32 %s134, 1
      %p138 = scmp.eq.s32.totalorder %s16, 1
      %p139 = scmp.ne.s32.totalorder %s134, %s136
      %p140 = scmp.eq.s32.totalorder %s16, 0
      %p141 = por %p139, %p140
      %p142 = scmp.ne.s32.totalorder %s134, %s136
      %p143 = scmp.eq.s32.totalorder %s21, 1
      %p144 = por %p142, %p143
      %p145 = scmp.ne.s32.totalorder %s136, %s137
      %p146 = scmp.eq.s32.totalorder %s21, 0
      %p147 = por %p145, %p146
      %p148 = scmp.ne.s32.totalorder %s136, %s137
      %p149 = scmp.eq.s32.totalorder %s22, 1
      %p150 = por %p148, %p149
      %p152 = scmp.ne.s32.totalorder %s137, %s151
      %p153 = scmp.eq.s32.totalorder %s22, 0
      %p154 = por %p152, %p153
      %s156 = sadd.s32 %s155, 1
      %p159 = scmp.eq.s32.totalorder %s16, 1
      %p160 = scmp.ne.s32.totalorder %s155, %s157
      %p161 = scmp.eq.s32.totalorder %s16, 0
      %p162 = por %p160, %p161
      %p163 = scmp.ne.s32.totalorder %s155, %s157
      %p164 = scmp.eq.s32.totalorder %s21, 1
      %p165 = por %p163, %p164
      %p166 = scmp.ne.s32.totalorder %s157, %s158
      %p167 = scmp.eq.s32.totalorder %s21, 0
      %p168 = por %p166, %p167
      %p169 = scmp.ne.s32.totalorder %s157, %s158
      %p170 = scmp.eq.s32.totalorder %s22, 1
      %p171 = por %p169, %p170
      %p173 = scmp.ne.s32.totalorder %s158, %s172
      %p174 = scmp.eq.s32.totalorder %s22, 0
      %p175 = por %p173, %p174
      %s177 = sadd.s32 %s176, 1
      %p180 = scmp.eq.s32.totalorder %s16, 1
      %p181 = scmp.ne.s32.totalorder %s176, %s178
      %p182 = scmp.eq.s32.totalorder %s16, 0
      %p183 = por %p181, %p182
      %p184 = scmp.ne.s32.totalorder %s176, %s178
      %p185 = scmp.eq.s32.totalorder %s21, 1
      %p186 = por %p184, %p185
      %p187 = scmp.ne.s32.totalorder %s178, %s179
      %p188 = scmp.eq.s32.totalorder %s21, 0
      %p189 = por %p187, %p188
      %p190 = scmp.ne.s32.totalorder %s178, %s179
      %p191 = scmp.eq.s32.totalorder %s22, 1
      %p192 = por %p190, %p191
      %p194 = scmp.ne.s32.totalorder %s179, %s193
      %p195 = scmp.eq.s32.totalorder %s22, 0
      %p196 = por %p194, %p195
      %s198 = sadd.s32 %s197, 1
      %p201 = scmp.eq.s32.totalorder %s16, 1
      %p202 = scmp.ne.s32.totalorder %s197, %s199
      %p203 = scmp.eq.s32.totalorder %s16, 0
      %p204 = por %p202, %p203
      %p205 = scmp.ne.s32.totalorder %s197, %s199
      %p206 = scmp.eq.s32.totalorder %s21, 1
      %p207 = por %p205, %p206
      %p208 = scmp.ne.s32.totalorder %s199, %s200
      %p209 = scmp.eq.s32.totalorder %s21, 0
      %p210 = por %p208, %p209
      %p211 = scmp.ne.s32.totalorder %s199, %s200
      %p212 = scmp.eq.s32.totalorder %s22, 1
      %p213 = por %p211, %p212
      %p215 = scmp.ne.s32.totalorder %s200, %s214
      %p216 = scmp.eq.s32.totalorder %s22, 0
      %p217 = por %p215, %p216
      %s218 = ssub.s32 %s16, %s23
      %p219 = scmp.eq.s32.totalorder %s218, 0
      %s221 = sadd.s32 %s220, 1
      %s222 = scalar_select %p219, %s220, %s221
      %p225 = pneg %p219
      %p226 = scmp.eq.s32.totalorder %s16, 1
      %p227 = por %p225, %p226
      %p228 = scmp.ne.s32.totalorder %s220, %s223
      %p229 = scmp.eq.s32.totalorder %s16, 0
      %p230 = por %p228, %p229
      %p231 = scmp.ne.s32.totalorder %s220, %s223
      %p232 = scmp.eq.s32.totalorder %s21, 1
      %p233 = por %p231, %p232
      %p234 = scmp.ne.s32.totalorder %s223, %s224
      %p235 = scmp.eq.s32.totalorder %s21, 0
      %p236 = por %p234, %p235
      %p237 = scmp.ne.s32.totalorder %s223, %s224
      %p238 = scmp.eq.s32.totalorder %s22, 1
      %p239 = por %p237, %p238
      %p241 = scmp.ne.s32.totalorder %s224, %s240
      %p242 = scmp.eq.s32.totalorder %s22, 0
      %p243 = por %p241, %p242
      %p244 = scmp.le.s32.totalorder 1, %s16
      %p245 = scmp.lt.s32.totalorder %s16, 3
      %p246 = pnand %p244, %p245
      %p247 = pneg %p246
      // Predicated region
      $region9: #{tpu_custom_call.1} parent=5 // pred_check
        _
      $region10: #{tpu_custom_call.1} parent=5 // pred_check_branch
        %249 = sbr.rel (%p246) target = $region12
      $region11: #{tpu_custom_call.1} parent=5 // pred_region
        %s250 = ssub.s32 %s16, 1
        // Predicated region
        $region13: #{tpu_custom_call.1} parent=11 // pred_check
          %p251 = pneg %p63
        $region14: #{tpu_custom_call.1} parent=11 // pred_check_branch
          %253 = sbr.rel (%p251) target = $region16
        $region15: #{tpu_custom_call.1} parent=11 // pred_region
          _
        $region16: #{tpu_custom_call.1} parent=11 // pred_fallthru
          _
        // Predicated region
        $region17: #{tpu_custom_call.1} parent=11 // pred_check
          %p254 = pneg %p84
        $region18: #{tpu_custom_call.1} parent=11 // pred_check_branch
          %256 = sbr.rel (%p254) target = $region20
        $region19: #{tpu_custom_call.1} parent=11 // pred_region
          _
        $region20: #{tpu_custom_call.1} parent=11 // pred_fallthru
          _
        // Predicated region
        $region21: #{tpu_custom_call.1} parent=11 // pred_check
          %p257 = pneg %p105
        $region22: #{tpu_custom_call.1} parent=11 // pred_check_branch
          %259 = sbr.rel (%p257) target = $region24
        $region23: #{tpu_custom_call.1} parent=11 // pred_region
          _
        $region24: #{tpu_custom_call.1} parent=11 // pred_fallthru
          _
        // Predicated region
        $region25: #{tpu_custom_call.1} parent=11 // pred_check
          %p260 = pneg %p126
        $region26: #{tpu_custom_call.1} parent=11 // pred_check_branch
          %262 = sbr.rel (%p260) target = $region28
        $region27: #{tpu_custom_call.1} parent=11 // pred_region
          _
        $region28: #{tpu_custom_call.1} parent=11 // pred_fallthru
          _
        // Predicated region
        $region29: #{tpu_custom_call.1} parent=11 // pred_check
          %p263 = pneg %p147
        $region30: #{tpu_custom_call.1} parent=11 // pred_check_branch
          %265 = sbr.rel (%p263) target = $region32
        $region31: #{tpu_custom_call.1} parent=11 // pred_region
          %s267 = ssub.s32 2048, 2048
          %268 = vsyncadd [#allocation3], %s267
          %s269 = sshll.u32 [#allocation2], 4
          %s270 = int_to_ptr.vmem [resolvable:$true] %s269
          %275 = dma.hbm_to_vmem [thread:$0]  %s5, 2048, %s270, [#allocation3], 128, 128, 8
        $region32: #{tpu_custom_call.1} parent=11 // pred_fallthru
          _
        // Predicated region
        $region33: #{tpu_custom_call.1} parent=11 // pred_check
          %p276 = pneg %p168
        $region34: #{tpu_custom_call.1} parent=11 // pred_check_branch
          %278 = sbr.rel (%p276) target = $region36
        $region35: #{tpu_custom_call.1} parent=11 // pred_region
          _
        $region36: #{tpu_custom_call.1} parent=11 // pred_fallthru
          _
        // Predicated region
        $region37: #{tpu_custom_call.1} parent=11 // pred_check
          %p279 = pneg %p189
        $region38: #{tpu_custom_call.1} parent=11 // pred_check_branch
          %281 = sbr.rel (%p279) target = $region40
        $region39: #{tpu_custom_call.1} parent=11 // pred_region
          _
        $region40: #{tpu_custom_call.1} parent=11 // pred_fallthru
          _
        // Predicated region
        $region41: #{tpu_custom_call.1} parent=11 // pred_check
          %p282 = pneg %p210
        $region42: #{tpu_custom_call.1} parent=11 // pred_check_branch
          %284 = sbr.rel (%p282) target = $region44
        $region43: #{tpu_custom_call.1} parent=11 // pred_region
          _
        $region44: #{tpu_custom_call.1} parent=11 // pred_fallthru
          _
      $region12: #{tpu_custom_call.1} parent=5 // pred_fallthru
        _
      %p285 = scmp.lt.s32.totalorder %s16, 2
      // Predicated region
      $region45: #{tpu_custom_call.1} parent=5 // pred_check
        %p286 = pneg %p285
      $region46: #{tpu_custom_call.1} parent=5 // pred_check_branch
        %288 = sbr.rel (%p286) target = $region48
      $region47: #{tpu_custom_call.1} parent=5 // pred_region
        // Predicated region
        $region49: #{tpu_custom_call.1} parent=47 // pred_check
          %p289 = pneg %p36
        $region50: #{tpu_custom_call.1} parent=47 // pred_check_branch
          %291 = sbr.rel (%p289) target = $region52
        $region51: #{tpu_custom_call.1} parent=47 // pred_region
          %p292 = scmp.lt.s32.totalorder %s16, 1
          %s293 = scalar_select %p292, %s16, 1
          %s294 = smul.addr %s293, 8
          %s295 = scalar_lea.vmem %s0, %s294
        $region52: #{tpu_custom_call.1} parent=47 // pred_fallthru
          _
      $region48: #{tpu_custom_call.1} parent=5 // pred_fallthru
        _
      %p296 = scmp.le.s32.totalorder 1, %s16
      %p297 = scmp.lt.s32.totalorder %s16, 3
      %p298 = pnand %p296, %p297
      %p299 = pneg %p298
      // Predicated region
      $region53: #{tpu_custom_call.1} parent=5 // pred_check
        _
      $region54: #{tpu_custom_call.1} parent=5 // pred_check_branch
        %301 = sbr.rel (%p298) target = $region56
      $region55: #{tpu_custom_call.1} parent=5 // pred_region
        %s302 = ssub.s32 %s16, 1
        // Predicated region
        $region57: #{tpu_custom_call.1} parent=55 // pred_check
          %p303 = pneg %p147
        $region58: #{tpu_custom_call.1} parent=55 // pred_check_branch
          %305 = sbr.rel (%p303) target = $region60
        $region59: #{tpu_custom_call.1} parent=55 // pred_region
          %306 = dma.done [#allocation3], 2048
        $region60: #{tpu_custom_call.1} parent=55 // pred_fallthru
          _
        %p307 = scmp.lt.s32.totalorder %s21, 1
        %s308 = scalar_select %p307, %s21, 1
        %s309 = smul.addr %s308, 8
        %s310 = scalar_lea.vmem %s0, %s309
        %p311 = pneg %p42
        %p312 = pneg %p39
        %p313 = pneg %p63
        %p314 = pneg %p60
        %p315 = pneg %p84
        %p316 = pneg %p81
        %p317 = pneg %p105
        %p318 = pneg %p102
        %p319 = pneg %p126
        %p320 = pneg %p123
        %p321 = pneg %p147
        %p322 = pneg %p144
        %p323 = pneg %p168
        %p324 = pneg %p165
        %p325 = pneg %p189
        %p326 = pneg %p186
        %p327 = pneg %p210
        %p328 = pneg %p207
        %p329 = pneg %p236
        %p330 = pneg %p233
        %p331 = scmp.lt.s32.totalorder %s21, 1
        %s332 = scalar_select %p331, %s21, 1
        %s333 = smul.addr %s332, 8
        %s334 = scalar_lea.vmem %s9, %s333
        %p335 = scmp.lt.s32.totalorder %s21, 1
        %s336 = scalar_select %p335, %s21, 1
        %s337 = smul.addr %s336, 8
        %s338 = scalar_lea.vmem %s0, %s337
        %p339 = scmp.lt.s32.totalorder %s21, 1
        %s340 = scalar_select %p339, %s21, 1
        %s341 = smul.addr %s340, 8
        %s342 = scalar_lea.vmem %s9, %s341
        %v343 = vld [vmem:[%s338] sm:$0xff]
        %v344 = vld [vmem:[%s2] sm:$0x1]
        %v346 = vlaneseq
        %v347 = vshrl.u32 %v346, 7
        %v348 = vsub.s32 0, %v347
        %v349 = vrot.slane %v344, %v348
        %v351 = vadd.f32 %v349, 0.0
        %v352 = vld [vmem:[%s1] sm:$0x1]
        %354 = vset.pattern.permute.xlu0 0
        %355 = vperm.xlu0 %354, %v343
        %v356 = vpop.permute.xlu0 %355
        %v358 = vlaneseq
        %v359 = vshrl.u32 %v358, 7
        %v360 = vsub.s32 0, %v359
        %v361 = vrot.slane %v352, %v360
        %v362 = vmul.f32 %v356, %v361
        %v363 = vadd.f32 %v351, %v362
        %v364 = vld [vmem:[%s1 + $0x1] sm:$0x1]
        %365 = vset.pattern.permute.xlu0 1
        %366 = vperm.xlu0 %365, %v343
        %v367 = vpop.permute.xlu0 %366
        %v369 = vlaneseq
        %v370 = vshrl.u32 %v369, 7
        %v371 = vsub.s32 0, %v370
        %v372 = vrot.slane %v364, %v371
        %v373 = vmul.f32 %v367, %v372
        %v374 = vadd.f32 %v363, %v373
        %v375 = vld [vmem:[%s1 + $0x2] sm:$0x1]
        %376 = vset.pattern.permute.xlu0 2
        %377 = vperm.xlu0 %376, %v343
        %v378 = vpop.permute.xlu0 %377
        %v380 = vlaneseq
        %v381 = vshrl.u32 %v380, 7
        %v382 = vsub.s32 0, %v381
        %v383 = vrot.slane %v375, %v382
        %v384 = vmul.f32 %v378, %v383
        %v385 = vadd.f32 %v374, %v384
        %v386 = vld [vmem:[%s1 + $0x3] sm:$0x1]
        %387 = vset.pattern.permute.xlu0 3
        %388 = vperm.xlu0 %387, %v343
        %v389 = vpop.permute.xlu0 %388
        %v391 = vlaneseq
        %v392 = vshrl.u32 %v391, 7
        %v393 = vsub.s32 0, %v392
        %v394 = vrot.slane %v386, %v393
        %v395 = vmul.f32 %v389, %v394
        %v396 = vadd.f32 %v385, %v395
        %v397 = vtanh.pop %v396
        %v398 = vld [vmem:[%s3] sm:$0xff]
        %v399 = vld [vmem:[%s3 + $0x8] sm:$0xff]
        %v400 = vld [vmem:[%s3 + $0x10] sm:$0xff]
        %v401 = vld [vmem:[%s3 + $0x18] sm:$0xff]
        %v402 = vld [vmem:[%s3 + $0x20] sm:$0xff]
        %v403 = vld [vmem:[%s3 + $0x28] sm:$0xff]
        %v404 = vld [vmem:[%s3 + $0x30] sm:$0xff]
        %v405 = vld [vmem:[%s3 + $0x38] sm:$0xff]
        %v406 = vld [vmem:[%s3 + $0x40] sm:$0xff]
        %v407 = vld [vmem:[%s3 + $0x48] sm:$0xff]
        %v408 = vld [vmem:[%s3 + $0x50] sm:$0xff]
        %v409 = vld [vmem:[%s3 + $0x58] sm:$0xff]
        %v410 = vld [vmem:[%s3 + $0x60] sm:$0xff]
        %v411 = vld [vmem:[%s3 + $0x68] sm:$0xff]
        %v412 = vld [vmem:[%s3 + $0x70] sm:$0xff]
        %v413 = vld [vmem:[%s3 + $0x78] sm:$0xff]
        %v414 = vld [vmem:[%s4] sm:$0x1]
        %v416 = vlaneseq
        %v417 = vshrl.u32 %v416, 7
        %v418 = vsub.s32 0, %v417
        %v419 = vrot.slane %v414, %v418
        %421 = vmatprep.subr.mxu0 0.0
        %422 = vmatpush1.msra.mxu0 %v413
        %423 = vmatprep.subr.mxu0 0.0
        %424 = vmatpush1.msra.mxu0 %v412
        %425 = vmatprep.subr.mxu0 0.0
        %426 = vmatpush1.msra.mxu0 %v411
        %427 = vmatprep.subr.mxu0 0.0
        %428 = vmatpush1.msra.mxu0 %v410
        %429 = vmatprep.subr.mxu0 0.0
        %430 = vmatpush1.msra.mxu0 %v409
        %431 = vmatprep.subr.mxu0 0.0
        %432 = vmatpush1.msra.mxu0 %v408
        %433 = vmatprep.subr.mxu0 0.0
        %434 = vmatpush1.msra.mxu0 %v407
        %435 = vmatprep.subr.mxu0 0.0
        %436 = vmatpush1.msra.mxu0 %v406
        %437 = vmatprep.subr.mxu0 0.0
        %438 = vmatpush1.msra.mxu0 %v405
        %439 = vmatprep.subr.mxu0 0.0
        %440 = vmatpush1.msra.mxu0 %v404
        %441 = vmatprep.subr.mxu0 0.0
        %442 = vmatpush1.msra.mxu0 %v403
        %443 = vmatprep.subr.mxu0 0.0
        %444 = vmatpush1.msra.mxu0 %v402
        %445 = vmatprep.subr.mxu0 0.0
        %446 = vmatpush1.msra.mxu0 %v401
        %447 = vmatprep.subr.mxu0 0.0
        %448 = vmatpush1.msra.mxu0 %v400
        %449 = vmatprep.subr.mxu0 0.0
        %450 = vmatpush1.msra.mxu0 %v399
        %451 = vmatprep.subr.mxu0 0.0
        %452 = vmatpush1.msra.mxu0 %v398
        %453 = vmatprep.subr.mxu0 0.0
        %454 = vmatpush2.msra.mxu0 0.0
        %455 = vmatprep.subr.mxu0 0.0
        %456 = vmatpush2.msra.mxu0 0.0
        %457 = vmatprep.subr.mxu0 0.0
        %458 = vmatpush2.msra.mxu0 0.0
        %459 = vmatprep.subr.mxu0 0.0
        %460 = vmatpush2.msra.mxu0 0.0
        %461 = vmatprep.subr.mxu0 0.0
        %462 = vmatpush2.msra.mxu0 0.0
        %463 = vmatprep.subr.mxu0 0.0
        %464 = vmatpush2.msra.mxu0 0.0
        %465 = vmatprep.subr.mxu0 0.0
        %466 = vmatpush2.msra.mxu0 0.0
        %467 = vmatprep.subr.mxu0 0.0
        %468 = vmatpush2.msra.mxu0 0.0
        %469 = vmatprep.subr.mxu0 0.0
        %470 = vmatpush2.msra.mxu0 0.0
        %471 = vmatprep.subr.mxu0 0.0
        %472 = vmatpush2.msra.mxu0 0.0
        %473 = vmatprep.subr.mxu0 0.0
        %474 = vmatpush2.msra.mxu0 0.0
        %475 = vmatprep.subr.mxu0 0.0
        %476 = vmatpush2.msra.mxu0 0.0
        %477 = vmatprep.subr.mxu0 0.0
        %478 = vmatpush2.msra.mxu0 0.0
        %479 = vmatprep.subr.mxu0 0.0
        %480 = vmatpush2.msra.mxu0 0.0
        %481 = vmatprep.subr.mxu0 0.0
        %482 = vmatpush2.msra.mxu0 0.0
        %483 = vmatprep.subr.mxu0 0.0
        %484 = vmatpush2.msra.mxu0 0.0
        %485 = vmatprep.mubr.f32.mxu0 0.0
        %486 = vmatmul.mubr.f32.gmra.mxu0 %v397
        %v487 = vpop.f32.mrf.mxu0
        %v488 = vadd.f32 %v419, %v487
        %v489 = vpop.f32.mrf.mxu0
        %490 = vdwg.mxu0
        %v491 = vtanh.pop %v488
        %v492 = vld [vmem:[#allocation2] sm:$0xff]
        %v493 = vld [vmem:[#allocation2 + $0x8] sm:$0xff]
        %v494 = vld [vmem:[#allocation2 + $0x10] sm:$0xff]
        %v495 = vld [vmem:[#allocation2 + $0x18] sm:$0xff]
        %v496 = vld [vmem:[#allocation2 + $0x20] sm:$0xff]
        %v497 = vld [vmem:[#allocation2 + $0x28] sm:$0xff]
        %v498 = vld [vmem:[#allocation2 + $0x30] sm:$0xff]
        %v499 = vld [vmem:[#allocation2 + $0x38] sm:$0xff]
        %v500 = vld [vmem:[#allocation2 + $0x40] sm:$0xff]
        %v501 = vld [vmem:[#allocation2 + $0x48] sm:$0xff]
        %v502 = vld [vmem:[#allocation2 + $0x50] sm:$0xff]
        %v503 = vld [vmem:[#allocation2 + $0x58] sm:$0xff]
        %v504 = vld [vmem:[#allocation2 + $0x60] sm:$0xff]
        %v505 = vld [vmem:[#allocation2 + $0x68] sm:$0xff]
        %v506 = vld [vmem:[#allocation2 + $0x70] sm:$0xff]
        %v507 = vld [vmem:[#allocation2 + $0x78] sm:$0xff]
        %v508 = vld [vmem:[%s6] sm:$0x1]
        %v510 = vlaneseq
        %v511 = vshrl.u32 %v510, 7
        %v512 = vsub.s32 0, %v511
        %v513 = vrot.slane %v508, %v512
        %515 = vmatprep.subr.mxu0 0.0
        %516 = vmatpush1.msra.mxu0 %v507
        %517 = vmatprep.subr.mxu0 0.0
        %518 = vmatpush1.msra.mxu0 %v506
        %519 = vmatprep.subr.mxu0 0.0
        %520 = vmatpush1.msra.mxu0 %v505
        %521 = vmatprep.subr.mxu0 0.0
        %522 = vmatpush1.msra.mxu0 %v504
        %523 = vmatprep.subr.mxu0 0.0
        %524 = vmatpush1.msra.mxu0 %v503
        %525 = vmatprep.subr.mxu0 0.0
        %526 = vmatpush1.msra.mxu0 %v502
        %527 = vmatprep.subr.mxu0 0.0
        %528 = vmatpush1.msra.mxu0 %v501
        %529 = vmatprep.subr.mxu0 0.0
        %530 = vmatpush1.msra.mxu0 %v500
        %531 = vmatprep.subr.mxu0 0.0
        %532 = vmatpush1.msra.mxu0 %v499
        %533 = vmatprep.subr.mxu0 0.0
        %534 = vmatpush1.msra.mxu0 %v498
        %535 = vmatprep.subr.mxu0 0.0
        %536 = vmatpush1.msra.mxu0 %v497
        %537 = vmatprep.subr.mxu0 0.0
        %538 = vmatpush1.msra.mxu0 %v496
        %539 = vmatprep.subr.mxu0 0.0
        %540 = vmatpush1.msra.mxu0 %v495
        %541 = vmatprep.subr.mxu0 0.0
        %542 = vmatpush1.msra.mxu0 %v494
        %543 = vmatprep.subr.mxu0 0.0
        %544 = vmatpush1.msra.mxu0 %v493
        %545 = vmatprep.subr.mxu0 0.0
        %546 = vmatpush1.msra.mxu0 %v492
        %547 = vmatprep.subr.mxu0 0.0
        %548 = vmatpush2.msra.mxu0 0.0
        %549 = vmatprep.subr.mxu0 0.0
        %550 = vmatpush2.msra.mxu0 0.0
        %551 = vmatprep.subr.mxu0 0.0
        %552 = vmatpush2.msra.mxu0 0.0
        %553 = vmatprep.subr.mxu0 0.0
        %554 = vmatpush2.msra.mxu0 0.0
        %555 = vmatprep.subr.mxu0 0.0
        %556 = vmatpush2.msra.mxu0 0.0
        %557 = vmatprep.subr.mxu0 0.0
        %558 = vmatpush2.msra.mxu0 0.0
        %559 = vmatprep.subr.mxu0 0.0
        %560 = vmatpush2.msra.mxu0 0.0
        %561 = vmatprep.subr.mxu0 0.0
        %562 = vmatpush2.msra.mxu0 0.0
        %563 = vmatprep.subr.mxu0 0.0
        %564 = vmatpush2.msra.mxu0 0.0
        %565 = vmatprep.subr.mxu0 0.0
        %566 = vmatpush2.msra.mxu0 0.0
        %567 = vmatprep.subr.mxu0 0.0
        %568 = vmatpush2.msra.mxu0 0.0
        %569 = vmatprep.subr.mxu0 0.0
        %570 = vmatpush2.msra.mxu0 0.0
        %571 = vmatprep.subr.mxu0 0.0
        %572 = vmatpush2.msra.mxu0 0.0
        %573 = vmatprep.subr.mxu0 0.0
        %574 = vmatpush2.msra.mxu0 0.0
        %575 = vmatprep.subr.mxu0 0.0
        %576 = vmatpush2.msra.mxu0 0.0
        %577 = vmatprep.subr.mxu0 0.0
        %578 = vmatpush2.msra.mxu0 0.0
        %579 = vmatprep.mubr.f32.mxu0 0.0
        %580 = vmatmul.mubr.f32.gmra.mxu0 %v491
        %v581 = vpop.f32.mrf.mxu0
        %v582 = vadd.f32 %v513, %v581
        %v583 = vpop.f32.mrf.mxu0
        %584 = vdwg.mxu0
        %vm585 = vcmp.gt.f32.partialorder %v582, 0.0
        %v586 = vmul.f32 %v582, 0.01
        %v587 = vsel %vm585, %v582, %v586
        %v588 = vld [vmem:[%s7] sm:$0xff]
        %v589 = vld [vmem:[%s7 + $0x8] sm:$0xff]
        %v590 = vld [vmem:[%s7 + $0x10] sm:$0xff]
        %v591 = vld [vmem:[%s7 + $0x18] sm:$0xff]
        %v592 = vld [vmem:[%s7 + $0x20] sm:$0xff]
        %v593 = vld [vmem:[%s7 + $0x28] sm:$0xff]
        %v594 = vld [vmem:[%s7 + $0x30] sm:$0xff]
        %v595 = vld [vmem:[%s7 + $0x38] sm:$0xff]
        %v596 = vld [vmem:[%s7 + $0x40] sm:$0xff]
        %v597 = vld [vmem:[%s7 + $0x48] sm:$0xff]
        %v598 = vld [vmem:[%s7 + $0x50] sm:$0xff]
        %v599 = vld [vmem:[%s7 + $0x58] sm:$0xff]
        %v600 = vld [vmem:[%s7 + $0x60] sm:$0xff]
        %v601 = vld [vmem:[%s7 + $0x68] sm:$0xff]
        %v602 = vld [vmem:[%s7 + $0x70] sm:$0xff]
        %v603 = vld [vmem:[%s7 + $0x78] sm:$0xff]
        %v604 = vld [vmem:[%s8] sm:$0x1]
        %v606 = vlaneseq
        %v607 = vshrl.u32 %v606, 7
        %v608 = vsub.s32 0, %v607
        %v609 = vrot.slane %v604, %v608
        %611 = vmatprep.subr.mxu0 0.0
        %612 = vmatpush1.msra.mxu0 %v603
        %613 = vmatprep.subr.mxu0 0.0
        %614 = vmatpush1.msra.mxu0 %v602
        %615 = vmatprep.subr.mxu0 0.0
        %616 = vmatpush1.msra.mxu0 %v601
        %617 = vmatprep.subr.mxu0 0.0
        %618 = vmatpush1.msra.mxu0 %v600
        %619 = vmatprep.subr.mxu0 0.0
        %620 = vmatpush1.msra.mxu0 %v599
        %621 = vmatprep.subr.mxu0 0.0
        %622 = vmatpush1.msra.mxu0 %v598
        %623 = vmatprep.subr.mxu0 0.0
        %624 = vmatpush1.msra.mxu0 %v597
        %625 = vmatprep.subr.mxu0 0.0
        %626 = vmatpush1.msra.mxu0 %v596
        %627 = vmatprep.subr.mxu0 0.0
        %628 = vmatpush1.msra.mxu0 %v595
        %629 = vmatprep.subr.mxu0 0.0
        %630 = vmatpush1.msra.mxu0 %v594
        %631 = vmatprep.subr.mxu0 0.0
        %632 = vmatpush1.msra.mxu0 %v593
        %633 = vmatprep.subr.mxu0 0.0
        %634 = vmatpush1.msra.mxu0 %v592
        %635 = vmatprep.subr.mxu0 0.0
        %636 = vmatpush1.msra.mxu0 %v591
        %637 = vmatprep.subr.mxu0 0.0
        %638 = vmatpush1.msra.mxu0 %v590
        %639 = vmatprep.subr.mxu0 0.0
        %640 = vmatpush1.msra.mxu0 %v589
        %641 = vmatprep.subr.mxu0 0.0
        %642 = vmatpush1.msra.mxu0 %v588
        %643 = vmatprep.subr.mxu0 0.0
        %644 = vmatpush2.msra.mxu0 0.0
        %645 = vmatprep.subr.mxu0 0.0
        %646 = vmatpush2.msra.mxu0 0.0
        %647 = vmatprep.subr.mxu0 0.0
        %648 = vmatpush2.msra.mxu0 0.0
        %649 = vmatprep.subr.mxu0 0.0
        %650 = vmatpush2.msra.mxu0 0.0
        %651 = vmatprep.subr.mxu0 0.0
        %652 = vmatpush2.msra.mxu0 0.0
        %653 = vmatprep.subr.mxu0 0.0
        %654 = vmatpush2.msra.mxu0 0.0
        %655 = vmatprep.subr.mxu0 0.0
        %656 = vmatpush2.msra.mxu0 0.0
        %657 = vmatprep.subr.mxu0 0.0
        %658 = vmatpush2.msra.mxu0 0.0
        %659 = vmatprep.subr.mxu0 0.0
        %660 = vmatpush2.msra.mxu0 0.0
        %661 = vmatprep.subr.mxu0 0.0
        %662 = vmatpush2.msra.mxu0 0.0
        %663 = vmatprep.subr.mxu0 0.0
        %664 = vmatpush2.msra.mxu0 0.0
        %665 = vmatprep.subr.mxu0 0.0
        %666 = vmatpush2.msra.mxu0 0.0
        %667 = vmatprep.subr.mxu0 0.0
        %668 = vmatpush2.msra.mxu0 0.0
        %669 = vmatprep.subr.mxu0 0.0
        %670 = vmatpush2.msra.mxu0 0.0
        %671 = vmatprep.subr.mxu0 0.0
        %672 = vmatpush2.msra.mxu0 0.0
        %673 = vmatprep.subr.mxu0 0.0
        %674 = vmatpush2.msra.mxu0 0.0
        %675 = vmatprep.mubr.f32.mxu0 0.0
        %676 = vmatmul.mubr.f32.gmra.mxu0 %v587
        %v677 = vpop.f32.mrf.mxu0
        %v678 = vadd.f32 %v609, %v677
        %v679 = vpop.f32.mrf.mxu0
        %680 = vdwg.mxu0
        %vm681 = vcmask 64512
        %682 = vst.msk [vmem:[%s342] sm:$0xff] %vm681, %v678
        %p683 = scmp.lt.s32.totalorder %s21, 1
        %s684 = scalar_select %p683, %s21, 1
        %s685 = smul.addr %s684, 8
        %s686 = scalar_lea.vmem %s9, %s685
        // Predicated region
        $region61: #{tpu_custom_call.1} parent=55 // pred_check
          %p687 = pneg %p233
        $region62: #{tpu_custom_call.1} parent=55 // pred_check_branch
          %689 = sbr.rel (%p687) target = $region64
        $region63: #{tpu_custom_call.1} parent=55 // pred_region
          _
        $region64: #{tpu_custom_call.1} parent=55 // pred_fallthru
          _
      $region56: #{tpu_custom_call.1} parent=5 // pred_fallthru
        _
      %p690 = scmp.le.s32.totalorder 2, %s16
      // Predicated region
      $region65: #{tpu_custom_call.1} parent=5 // pred_check
        %p691 = pneg %p690
      $region66: #{tpu_custom_call.1} parent=5 // pred_check_branch
        %693 = sbr.rel (%p691) target = $region68
      $region67: #{tpu_custom_call.1} parent=5 // pred_region
        %s694 = ssub.s32 %s16, 2
        // Predicated region
        $region69: #{tpu_custom_call.1} parent=67 // pred_check
          %p695 = pneg %p239
        $region70: #{tpu_custom_call.1} parent=67 // pred_check_branch
          %697 = sbr.rel (%p695) target = $region72
        $region71: #{tpu_custom_call.1} parent=67 // pred_region
          %p698 = scmp.lt.s32.totalorder %s22, 1
          %s699 = scalar_select %p698, %s22, 1
          %s700 = smul.addr %s699, 8
          %s701 = scalar_lea.vmem %s9, %s700
        $region72: #{tpu_custom_call.1} parent=67 // pred_fallthru
          _
      $region68: #{tpu_custom_call.1} parent=5 // pred_fallthru
        _
    $region6: #{tpu_custom_call.1} parent=1 // loop_footer
      %s20 = sadd.s32 1, %s16
    $region7: #{tpu_custom_call.1} parent=1 // loop_footer_branch
      %15 = sbr.rel target = $region3
    $region8: #{tpu_custom_call.1} parent=1 // loop_exit
      _
    %702 = vsyncpa [#allocation3], 1
    %s703 = scalar_lea.sflag [#allocation3], 1
    %704 = vsyncpa %s703, 1

</llo_original>
